<compile_context>
chip_gen: v7x
topology: tpu7x:2x2x1
jax: 0.10.0
libtpu: 0.0.40
codegen_flags: <defaults>
</compile_context>

<pallas_src>
import numpy as np
import jax
import jax.numpy as jnp
from jax.experimental import pallas as pl
from jax.experimental.pallas import tpu as pltpu

VMEM_LIMIT = 32 * 1024 * 1024  # fits every generation; re-tune per chip at prod shapes


# ----------------------------------------------------------------------------
# Glue: exact PyTorch semantics expressed as small dense matrices
# ----------------------------------------------------------------------------
def adaptive_avg_pool_matrix(in_size: int, out_size: int) -> np.ndarray:
    """Row p averages input window [floor(p*I/O), ceil((p+1)*I/O))  (PyTorch)."""
    A = np.zeros((out_size, in_size), dtype=np.float32)
    for p in range(out_size):
        start = (p * in_size) // out_size
        end = -((-(p + 1) * in_size) // out_size)  # ceil((p+1)*I/O)
        A[p, start:end] = 1.0 / float(end - start)
    return A


def bilinear_upsample_matrix(out_size: int, in_size: int) -> np.ndarray:
    """F.interpolate(mode='bilinear', align_corners=True), 1-D factor."""
    B = np.zeros((out_size, in_size), dtype=np.float32)
    for i in range(out_size):
        if in_size == 1:
            B[i, 0] = 1.0
            continue
        src = i * (in_size - 1) / (out_size - 1)
        i0 = min(int(np.floor(src)), in_size - 2)
        w1 = src - i0
        B[i, i0] += 1.0 - w1
        B[i, i0 + 1] += w1
    return B


# ----------------------------------------------------------------------------
# Kernel 1: HW-tiled pooling reduction -> fused block-masked 1x1 + BN + ReLU
# ----------------------------------------------------------------------------
def ppm_pool_z(x_flat, A_all, W_cat, blk_mask, scale, shift, *, tile_hw):
    N, HW, C = x_flat.shape
    S = A_all.shape[0]
    FR = W_cat.shape[1]
    assert HW % tile_hw == 0 and tile_hw % 128 == 0
    T = HW // tile_hw

    def kernel(x_ref, a_ref, w_ref, m_ref, sc_ref, sh_ref, z_ref, pooled_acc):
        t = pl.program_id(1)

        @pl.when(t == 0)
        def _():
            pooled_acc[...] = jnp.zeros_like(pooled_acc)

        # partial adaptive-average-pool of this HW tile for ALL branches at once
        pooled_acc[...] += jnp.dot(a_ref[...], x_ref[0].astype(jnp.float32),
                                   preferred_element_type=jnp.float32)

        @pl.when(t == pl.num_programs(1) - 1)
        def _():
            # all branches' 1x1 convs in one matmul; the block mask removes the
            # cross-branch terms (equivalent to independent per-branch convs).
            z = jnp.dot(pooled_acc[...], w_ref[...],
                        preferred_element_type=jnp.float32)
            z = jnp.maximum(z * sc_ref[...] + sh_ref[...], 0.0) * m_ref[...]
            z_ref[0] = z

    cost = pl.CostEstimate(
        flops=int(2 * N * S * HW * C + 2 * N * S * C * FR),
        transcendentals=0,
        bytes_accessed=int(N * HW * C * 2 + S * HW * 4 + C * FR * 4 + N * S * FR * 4),
    )
    return pl.pallas_call(
        kernel,
        out_shape=jax.ShapeDtypeStruct((N, S, FR), jnp.float32),
        grid=(N, T),
        in_specs=[
            pl.BlockSpec((1, tile_hw, C), lambda n, t: (n, t, 0)),
            pl.BlockSpec((S, tile_hw), lambda n, t: (0, t)),
            pl.BlockSpec((C, FR), lambda n, t: (0, 0)),
            pl.BlockSpec((S, FR), lambda n, t: (0, 0)),
            pl.BlockSpec((1, FR), lambda n, t: (0, 0)),
            pl.BlockSpec((1, FR), lambda n, t: (0, 0)),
        ],
        out_specs=pl.BlockSpec((1, S, FR), lambda n, t: (n, 0, 0)),
        scratch_shapes=[pltpu.VMEM((S, C), jnp.float32)],
        compiler_params=pltpu.CompilerParams(
            dimension_semantics=("parallel", "arbitrary"),
            vmem_limit_bytes=VMEM_LIMIT),
        cost_estimate=cost,
    )(x_flat, A_all, W_cat, blk_mask, scale, shift)


# ----------------------------------------------------------------------------
# Kernel 2: fused upsample + [x|up] cat (VMEM only) + 3x3 conv + BN + ReLU
#           + partial global average pool, HW-tiled with a 1-row halo
# ----------------------------------------------------------------------------
def fused_head(x_flat, z, B_cat, w_taps, fscale, fshift, *, H, W, tile_rows):
    N, HW, C = x_flat.shape
    S, FR = z.shape[1], z.shape[2]
    Cc = C + FR
    Cout = w_taps.shape[-1]
    TR = tile_rows
    THW = TR * W
    assert HW == H * W and H % TR == 0 and W % 8 == 0 and THW % 128 == 0
    assert C % 128 == 0 and FR % 128 == 0 and Cout % 128 == 0
    assert w_taps.shape == (9, Cc, Cout)
    T = H // TR

    def kernel(z_ref, bm_ref, bt_ref, bb_ref, xm_ref, xt_ref, xb_ref,
               w_ref, sc_ref, sh_ref, o_ref, pad_ref):
        t = pl.program_id(1)
        last = pl.num_programs(1) - 1
        zv = z_ref[0]                                            # (S, FR) f32
        zeros_row = jnp.zeros((W, Cc), jnp.bfloat16)

        # Guard rows: only ever read for column-masked output positions, but
        # keep them deterministic.  All store offsets are multiples of W (>=8)
        # and the column split C is a multiple of 128 -> aligned stores.
        pad_ref[pl.ds(0, W), :] = zeros_row
        pad_ref[pl.ds(3 * W + THW, W), :] = zeros_row

        # main tile rows: [x | up] written directly into the padded scratch
        up = jnp.dot(bm_ref[...], zv, preferred_element_type=jnp.float32)
        pad_ref[pl.ds(2 * W, THW), pl.ds(0, C)] = xm_ref[0]
        pad_ref[pl.ds(2 * W, THW), pl.ds(C, FR)] = up.astype(jnp.bfloat16)

        # top halo (previous image row); zero padding at the image top
        @pl.when(t == 0)
        def _():
            pad_ref[pl.ds(W, W), :] = zeros_row

        @pl.when(t > 0)
        def _():
            up_t = jnp.dot(bt_ref[...], zv, preferred_element_type=jnp.float32)
            pad_ref[pl.ds(W, W), pl.ds(0, C)] = xt_ref[0]
            pad_ref[pl.ds(W, W), pl.ds(C, FR)] = up_t.astype(jnp.bfloat16)

        # bottom halo (next image row); zero padding at the image bottom
        @pl.when(t == last)
        def _():
            pad_ref[pl.ds(2 * W + THW, W), :] = zeros_row

        @pl.when(t < last)
        def _():
            up_b = jnp.dot(bb_ref[...], zv, preferred_element_type=jnp.float32)
            pad_ref[pl.ds(2 * W + THW, W), pl.ds(0, C)] = xb_ref[0]
            pad_ref[pl.ds(2 * W + THW, W), pl.ds(C, FR)] = up_b.astype(jnp.bfloat16)

        # 3x3 conv as 9 statically shifted windows of the padded slab.
        # Row (di) boundaries are handled by the zero halos; column (dj)
        # boundaries are masked AFTER the matmul on the (THW, Cout) result.
        acc_c = jnp.zeros((THW, Cout), jnp.float32)
        acc_l = jnp.zeros((THW, Cout), jnp.float32)
        acc_r = jnp.zeros((THW, Cout), jnp.float32)
        for kh in range(3):
            for kw in range(3):
                di, dj = kh - 1, kw - 1
                start = (di + 2) * W + dj                        # static offset
                win = pad_ref[pl.ds(start, THW), :]              # (THW, Cc) bf16
                tap = jnp.dot(win, w_ref[kh * 3 + kw],
                              preferred_element_type=jnp.float32)
                if dj < 0:
                    acc_l += tap
                elif dj > 0:
                    acc_r += tap
                else:
                    acc_c += tap
        col = jax.lax.broadcasted_iota(jnp.int32, (THW, 1), 0) % W
        acc = (acc_c
               + jnp.where(col > 0, acc_l, 0.0)
               + jnp.where(col < W - 1, acc_r, 0.0))
        y = jnp.maximum(acc * sc_ref[...] + sh_ref[...], 0.0)    # BN + ReLU

        # partial global-average-pool as an MXU ones-row matmul (1/HW folded in)
        mean_row = jnp.full((1, THW), 1.0 / (H * W), jnp.float32)
        o_ref[0, 0] = jnp.dot(mean_row, y, preferred_element_type=jnp.float32)

    cost = pl.CostEstimate(
        flops=int(2 * N * HW * S * FR + 2 * N * 9 * HW * Cc * Cout + 2 * N * HW * Cout),
        transcendentals=0,
        bytes_accessed=int(N * HW * C * 2 * (1 + 2.0 / TR) + HW * S * 4
                           + 9 * Cc * Cout * 2 + N * S * FR * 4 + N * T * Cout * 4),
    )
    return pl.pallas_call(
        kernel,
        out_shape=jax.ShapeDtypeStruct((N, T, 1, Cout), jnp.float32),
        grid=(N, T),
        in_specs=[
            pl.BlockSpec((1, S, FR), lambda n, t: (n, 0, 0)),
            pl.BlockSpec((THW, S), lambda n, t: (t, 0)),
            pl.BlockSpec((W, S), lambda n, t: (jnp.maximum(t * TR - 1, 0), 0)),
            pl.BlockSpec((W, S), lambda n, t: (jnp.minimum((t + 1) * TR, H - 1), 0)),
            pl.BlockSpec((1, THW, C), lambda n, t: (n, t, 0)),
            pl.BlockSpec((1, W, C), lambda n, t: (n, jnp.maximum(t * TR - 1, 0), 0)),
            pl.BlockSpec((1, W, C), lambda n, t: (n, jnp.minimum((t + 1) * TR, H - 1), 0)),
            pl.BlockSpec((9, Cc, Cout), lambda n, t: (0, 0, 0)),
            pl.BlockSpec((1, Cout), lambda n, t: (0, 0)),
            pl.BlockSpec((1, Cout), lambda n, t: (0, 0)),
        ],
        out_specs=pl.BlockSpec((1, 1, 1, Cout), lambda n, t: (n, t, 0, 0)),
        scratch_shapes=[pltpu.VMEM((THW + 4 * W, Cc), jnp.bfloat16)],
        compiler_params=pltpu.CompilerParams(
            dimension_semantics=("parallel", "parallel"),
            vmem_limit_bytes=VMEM_LIMIT),
        cost_estimate=cost,
    )(z, B_cat, B_cat, B_cat, x_flat, x_flat, x_flat, w_taps, fscale, fshift)


# ----------------------------------------------------------------------------
# Forward pass (PPM + final head), mirroring PSPNet.forward after the backbone
# ----------------------------------------------------------------------------
def pspnet_forward(x_nchw, params, *, tile_rows=4):
    N, C, H, W = x_nchw.shape
    HW = H * W
    # bf16 at the kernel boundary: halves HBM traffic of the largest operand.
    x = jnp.transpose(x_nchw, (0, 2, 3, 1)).reshape(N, HW, C).astype(jnp.bfloat16)
    z = ppm_pool_z(x, params["A"], params["W"], params["mask"],
                   params["ppm_scale"], params["ppm_shift"],
                   tile_hw=tile_rows * W)                          # (N, S, 4R)
    partials = fused_head(x, z, params["B"], params["w_taps"],
                          params["final_scale"], params["final_shift"],
                          H=H, W=W, tile_rows=tile_rows)           # (N, T, 1, Cout)
    y = jnp.sum(partials, axis=(1, 2))                             # (N, Cout)
    return y.reshape(N, -1, 1, 1)                                  # (N, Cout, 1, 1)


# ----------------------------------------------------------------------------
# Pure-JAX f32 reference (independent per-branch + pad-based conv path)
# ----------------------------------------------------------------------------
def reference_forward(x_nchw, params):
    ref = params["ref"]
    N, C, H, W = x_nchw.shape
    x = jnp.transpose(x_nchw, (0, 2, 3, 1)).reshape(N, H * W, C)
    outs = [x]
    for A, B, w, sc, sh in zip(ref["A"], ref["B"], ref["w"],
                               ref["scale"], ref["shift"]):
        pooled = jnp.einsum("sp,npc->nsc", A, x)
        y = jnp.maximum(jnp.einsum("nsc,cr->nsr", pooled, w) * sc + sh, 0.0)
        outs.append(jnp.einsum("ps,nsr->npr", B, y))
    cat = jnp.concatenate(outs, axis=-1)
    img = cat.reshape(N, H, W, -1)
    pad = jnp.pad(img, ((0, 0), (1, 1), (1, 1), (0, 0)))
    y = 0.0
    for kh in range(3):
        for kw in range(3):
            y = y + jnp.einsum("nhwc,co->nhwo",
                               pad[:, kh:kh + H, kw:kw + W, :],
                               ref["w_taps"][kh * 3 + kw])
    y = jnp.maximum(y * ref["fscale"] + ref["fshift"], 0.0)
    return jnp.mean(y, axis=(1, 2)).reshape(N, -1, 1, 1)


# ----------------------------------------------------------------------------
# Deterministic parameter init (kaiming_normal conv weights, eval-mode BN fold)
# ----------------------------------------------------------------------------
def init_params(key, C_in, R, settings, H, W, Cout):
    eps = 1e-5
    nb = len(settings)
    S_total = sum(s * s for s in settings)
    S_pad = ((S_total + 15) // 16) * 16            # 50 -> 64: bf16-sublane friendly
    HW = H * W
    keys = jax.random.split(key, nb + 1)

    A_list, B_list, w_list, sc_list, sh_list = [], [], [], [], []
    A_all = np.zeros((S_pad, HW), np.float32)
    B_cat = np.zeros((HW, S_pad), np.float32)
    mask = np.zeros((S_pad, nb * R), np.float32)
    off = 0
    for bi, (s, k) in enumerate(zip(settings, keys[:-1])):
        std = (2.0 / C_in) ** 0.5                  # kaiming_normal, fan_in = C_in*1*1
        w = std * jax.random.normal(k, (C_in, R), dtype=jnp.float32)
        A = np.kron(adaptive_avg_pool_matrix(H, s), adaptive_avg_pool_matrix(W, s))
        B = np.kron(bilinear_upsample_matrix(H, s), bilinear_upsample_matrix(W, s))
        sc = np.full((1, R), 1.0 / np.sqrt(1.0 + eps), np.float32)   # eval-mode BN fold
        sh = np.zeros((1, R), np.float32)
        A_list.append(A); B_list.append(B); w_list.append(w)
        sc_list.append(sc); sh_list.append(sh)
        A_all[off:off + s * s, :] = A
        B_cat[:, off:off + s * s] = B
        mask[off:off + s * s, bi * R:(bi + 1) * R] = 1.0
        off += s * s

    W_cat = jnp.concatenate(w_list, axis=1)        # (C_in, nb*R) f32
    sc_cat = np.concatenate(sc_list, axis=1)
    sh_cat = np.concatenate(sh_list, axis=1)

    Cc = C_in + nb * R
    std = (2.0 / (Cc * 9)) ** 0.5                  # kaiming_normal, fan_in = Cc*3*3
    wf = std * jax.random.normal(keys[-1], (Cout, Cc, 3, 3), dtype=jnp.float32)
    # (Cout, Cin, kh, kw) -> (kh*3+kw, Cin, Cout): per-tap right-multiply weights
    w_taps = jnp.transpose(wf, (2, 3, 1, 0)).reshape(9, Cc, Cout)
    fsc = np.full((1, Cout), 1.0 / np.sqrt(1.0 + eps), np.float32)
    fsh = np.zeros((1, Cout), np.float32)

    return dict(
        A=jnp.asarray(A_all),                      # f32 (small, accuracy-relevant)
        B=jnp.asarray(B_cat),                      # f32
        W=W_cat,                                   # f32
        mask=jnp.asarray(mask),
        ppm_scale=jnp.asarray(sc_cat),
        ppm_shift=jnp.asarray(sh_cat),
        w_taps=w_taps.astype(jnp.bfloat16),        # large: bf16 for HBM/VMEM traffic
        final_scale=jnp.asarray(fsc),
        final_shift=jnp.asarray(fsh),
        ref=dict(A=[jnp.asarray(a) for a in A_list],
                 B=[jnp.asarray(b) for b in B_list],
                 w=w_list,
                 scale=[jnp.asarray(v) for v in sc_list],
                 shift=[jnp.asarray(v) for v in sh_list],
                 w_taps=w_taps, fscale=jnp.asarray(fsc), fshift=jnp.asarray(fsh)),
    )


if __name__ == "__main__":
    key = jax.random.PRNGKey(0)
    kx, kp = jax.random.split(key)

    # Scaled-down PSPNet head shapes (original: in_dim=2048, reduction_dim=512,
    # final out=2048, backbone map ~60x60).  Channel dims are kept multiples of
    # 128 so lane/MXU behaviour is representative; H=W=32 with 4-row HW tiles
    # exercises the tiled/halo path (grid = (N, 8) per kernel).
    N, C_in, H, W = 2, 256, 32, 32
    R, Cout = 64, 256
    settings = (1, 2, 3, 6)

    x = jax.random.normal(kx, (N, C_in, H, W), dtype=jnp.float32)  # backbone features
    params = init_params(kp, C_in, R, settings, H, W, Cout)

    out = pspnet_forward(x, params, tile_rows=4)
    jax.block_until_ready(out)
    assert out.shape == (N, Cout, 1, 1) and out.dtype == jnp.float32

    # bf16-operand kernels vs. pure-f32 JAX reference (loose tolerance for bf16)
    ref = reference_forward(x, params)
    np.testing.assert_allclose(np.asarray(out), np.asarray(ref), rtol=0.1, atol=0.05)

    print("KERNEL_OK")
</pallas_src>

<mosaic_0001>
module attributes {stable_mosaic.version = 11 : i64} {
  func.func @kernel(%arg0: i32, %arg1: i32, %arg2: memref<1x128x256xbf16, #tpu.memory_space<vmem>>, %arg3: memref<64x128xf32, #tpu.memory_space<vmem>>, %arg4: memref<256x256xf32, #tpu.memory_space<vmem>>, %arg5: memref<64x256xf32, #tpu.memory_space<vmem>>, %arg6: memref<1x256xf32, #tpu.memory_space<vmem>>, %arg7: memref<1x256xf32, #tpu.memory_space<vmem>>, %arg8: memref<1x64x256xf32, #tpu.memory_space<vmem>>, %arg9: memref<64x256xf32, #tpu.memory_space<vmem>>) attributes {dimension_semantics = [#tpu.dimension_semantics<parallel>, #tpu.dimension_semantics<arbitrary>], iteration_bounds = array<i64: 2, 8>, scalar_prefetch = 0 : i64, scratch_operands = 1 : i64, tpu.core_type = #tpu.core_type<tc>, window_params = [{transform_indices = @transform_0, window_bounds = array<i64: 1, 128, 256>}, {transform_indices = @transform_1, window_bounds = array<i64: 64, 128>}, {pipeline_mode = #tpu.pipeline_mode<synchronous>, transform_indices = @transform_2, window_bounds = array<i64: 256, 256>}, {pipeline_mode = #tpu.pipeline_mode<synchronous>, transform_indices = @transform_3, window_bounds = array<i64: 64, 256>}, {pipeline_mode = #tpu.pipeline_mode<synchronous>, transform_indices = @transform_4, window_bounds = array<i64: 1, 256>}, {pipeline_mode = #tpu.pipeline_mode<synchronous>, transform_indices = @transform_5, window_bounds = array<i64: 1, 256>}, {transform_indices = @transform_6, window_bounds = array<i64: 1, 64, 256>}]} {
    %c0_i32 = arith.constant 0 : i32
    %0 = arith.cmpi eq, %arg1, %c0_i32 : i32
    %1 = arith.extui %0 : i1 to i32
    %c0_i32_0 = arith.constant 0 : i32
    %2 = arith.cmpi ne, %1, %c0_i32_0 : i32
    scf.if %2 {
      %cst_10 = arith.constant 0.000000e+00 : f32
      %14 = vector.broadcast %cst_10 : f32 to vector<64x256xf32>
      %c0_11 = arith.constant 0 : index
      %c0_12 = arith.constant 0 : index
      %15 = vector.load %arg9[%c0_11, %c0_12] : memref<64x256xf32, #tpu.memory_space<vmem>>, vector<64x256xf32>
      tpu.vector_store %arg9[%c0_11, %c0_12], %14 {strides = array<i32>} : memref<64x256xf32, #tpu.memory_space<vmem>>, vector<64x256xf32>,
    } else {
    }
    %c0 = arith.constant 0 : index
    %c0_1 = arith.constant 0 : index
    %3 = vector.load %arg9[%c0, %c0_1] : memref<64x256xf32, #tpu.memory_space<vmem>>, vector<64x256xf32>
    %c0_2 = arith.constant 0 : index
    %c0_3 = arith.constant 0 : index
    %4 = vector.load %arg3[%c0_2, %c0_3] : memref<64x128xf32, #tpu.memory_space<vmem>>, vector<64x128xf32>
    %c0_4 = arith.constant 0 : index
    %c0_5 = arith.constant 0 : index
    %c0_6 = arith.constant 0 : index
    %5 = vector.load %arg2[%c0_4, %c0_5, %c0_6] : memref<1x128x256xbf16, #tpu.memory_space<vmem>>, vector<1x128x256xbf16>
    %6 = vector.shape_cast %5 : vector<1x128x256xbf16> to vector<128x256xbf16>
    %7 = arith.extf %6 : vector<128x256xbf16> to vector<128x256xf32>
    %cst = arith.constant dense<0.000000e+00> : vector<64x256xf32>
    %8 = tpu.matmul %4, %7, %cst {dimension_numbers = #tpu.dot_dimension_numbers<[1], [0], [0], [1], [0, 0, 1, 1], [], []>} : vector<64x128xf32>, vector<128x256xf32>, vector<64x256xf32> -> vector<64x256xf32>
    %9 = arith.addf %3, %8 : vector<64x256xf32>
    %c0_7 = arith.constant 0 : index
    %c0_8 = arith.constant 0 : index
    %10 = vector.load %arg9[%c0_7, %c0_8] : memref<64x256xf32, #tpu.memory_space<vmem>>, vector<64x256xf32>
    tpu.vector_store %arg9[%c0_7, %c0_8], %9 {strides = array<i32>} : memref<64x256xf32, #tpu.memory_space<vmem>>, vector<64x256xf32>,
    %c7_i32 = arith.constant 7 : i32
    %11 = arith.cmpi eq, %arg1, %c7_i32 : i32
    %12 = arith.extui %11 : i1 to i32
    %c0_i32_9 = arith.constant 0 : i32
    %13 = arith.cmpi ne, %12, %c0_i32_9 : i32
    scf.if %13 {
      %c0_10 = arith.constant 0 : index
      %c0_11 = arith.constant 0 : index
      %14 = vector.load %arg9[%c0_10, %c0_11] : memref<64x256xf32, #tpu.memory_space<vmem>>, vector<64x256xf32>
      %c0_12 = arith.constant 0 : index
      %c0_13 = arith.constant 0 : index
      %15 = vector.load %arg4[%c0_12, %c0_13] : memref<256x256xf32, #tpu.memory_space<vmem>>, vector<256x256xf32>
      %cst_14 = arith.constant dense<0.000000e+00> : vector<64x256xf32>
      %16 = tpu.matmul %14, %15, %cst_14 {dimension_numbers = #tpu.dot_dimension_numbers<[1], [0], [0], [1], [0, 0, 1, 1], [], []>} : vector<64x256xf32>, vector<256x256xf32>, vector<64x256xf32> -> vector<64x256xf32>
      %c0_15 = arith.constant 0 : index
      %c0_16 = arith.constant 0 : index
      %17 = vector.load %arg6[%c0_15, %c0_16] : memref<1x256xf32, #tpu.memory_space<vmem>>, vector<1x256xf32>
      %18 = vector.broadcast %17 : vector<1x256xf32> to vector<64x256xf32>
      %19 = arith.mulf %16, %18 : vector<64x256xf32>
      %c0_17 = arith.constant 0 : index
      %c0_18 = arith.constant 0 : index
      %20 = vector.load %arg7[%c0_17, %c0_18] : memref<1x256xf32, #tpu.memory_space<vmem>>, vector<1x256xf32>
      %21 = vector.broadcast %20 : vector<1x256xf32> to vector<64x256xf32>
      %22 = arith.addf %19, %21 : vector<64x256xf32>
      %cst_19 = arith.constant 0.000000e+00 : f32
      %23 = vector.broadcast %cst_19 : f32 to vector<64x256xf32>
      %24 = arith.maximumf %22, %23 : vector<64x256xf32>
      %c0_20 = arith.constant 0 : index
      %c0_21 = arith.constant 0 : index
      %25 = vector.load %arg5[%c0_20, %c0_21] : memref<64x256xf32, #tpu.memory_space<vmem>>, vector<64x256xf32>
      %26 = arith.mulf %24, %25 : vector<64x256xf32>
      %c0_22 = arith.constant 0 : index
      %c0_23 = arith.constant 0 : index
      %c0_24 = arith.constant 0 : index
      %27 = vector.load %arg8[%c0_22, %c0_23, %c0_24] : memref<1x64x256xf32, #tpu.memory_space<vmem>>, vector<1x64x256xf32>
      %28 = vector.shape_cast %27 : vector<1x64x256xf32> to vector<64x256xf32>
      %29 = vector.shape_cast %26 : vector<64x256xf32> to vector<1x64x256xf32>
      tpu.vector_store %arg8[%c0_22, %c0_23, %c0_24], %29 {strides = array<i32>} : memref<1x64x256xf32, #tpu.memory_space<vmem>>, vector<1x64x256xf32>,
    } else {
    }
    return
  }
  func.func @transform_0(%arg0: i32, %arg1: i32) -> (i32, i32, i32) {
    %c0_i32 = arith.constant 0 : i32
    %c0_i32_0 = arith.constant 0 : i32
    return %arg0, %arg1, %c0_i32 : i32, i32, i32
  }
  func.func @transform_1(%arg0: i32, %arg1: i32) -> (i32, i32) {
    %c0_i32 = arith.constant 0 : i32
    %c0_i32_0 = arith.constant 0 : i32
    return %c0_i32, %arg1 : i32, i32
  }
  func.func @transform_2(%arg0: i32, %arg1: i32) -> (i32, i32) {
    %c0_i32 = arith.constant 0 : i32
    %c0_i32_0 = arith.constant 0 : i32
    %c0_i32_1 = arith.constant 0 : i32
    return %c0_i32, %c0_i32_0 : i32, i32
  }
  func.func @transform_3(%arg0: i32, %arg1: i32) -> (i32, i32) {
    %c0_i32 = arith.constant 0 : i32
    %c0_i32_0 = arith.constant 0 : i32
    %c0_i32_1 = arith.constant 0 : i32
    return %c0_i32, %c0_i32_0 : i32, i32
  }
  func.func @transform_4(%arg0: i32, %arg1: i32) -> (i32, i32) {
    %c0_i32 = arith.constant 0 : i32
    %c0_i32_0 = arith.constant 0 : i32
    %c0_i32_1 = arith.constant 0 : i32
    return %c0_i32, %c0_i32_0 : i32, i32
  }
  func.func @transform_5(%arg0: i32, %arg1: i32) -> (i32, i32) {
    %c0_i32 = arith.constant 0 : i32
    %c0_i32_0 = arith.constant 0 : i32
    %c0_i32_1 = arith.constant 0 : i32
    return %c0_i32, %c0_i32_0 : i32, i32
  }
  func.func @transform_6(%arg0: i32, %arg1: i32) -> (i32, i32, i32) {
    %c0_i32 = arith.constant 0 : i32
    %c0_i32_0 = arith.constant 0 : i32
    %c0_i32_1 = arith.constant 0 : i32
    return %arg0, %c0_i32, %c0_i32_0 : i32, i32, i32
  }
}

</mosaic_0001>

<llo_original>
// kernel: tpu_custom_call.1
$region0: #{tpu_custom_call.1}
  #allocation0 [shape = 'u32[]', space=smem, size = 0x4, offset = 0x4, fixed_abs, tag = 'smem constant byte address 0x4 - core index']
  #allocation1 [shape = 'u32[144,128]{1,0:T(1,128)}', space=vmem, size = 0x12000, scoped, tag = 'internal scratch']
  #allocation2 [shape = 'f32[64,256]{1,0:T(8,128)}', space=vmem, size = 0x10000, scoped, tag = 'scratch operand']
  %s0 = inlined_call_operand.hbm [shape: bf16[2,1024,256], index: 0, kind: input, shape index: {}]
  %s1 = inlined_call_operand.hbm [shape: f32[64,1024], index: 1, kind: input, shape index: {}]
  %s2 = inlined_call_operand.hbm [shape: f32[256,256], index: 2, kind: input, shape index: {}]
  %s3 = inlined_call_operand.hbm [shape: f32[64,256], index: 3, kind: input, shape index: {}]
  %s4 = inlined_call_operand.vmem [shape: f32[1,256], index: 4, kind: input, shape index: {}]
  %s5 = inlined_call_operand.vmem [shape: f32[1,256], index: 5, kind: input, shape index: {}]
  %s6 = inlined_call_operand.hbm [shape: f32[2,64,256], index: 6, kind: output, shape index: {}]
  %s7 = sld [smem:[#allocation0]]
  $region81: #{tpu_custom_call.1} parent=0
    _
  %s9 = ssub.s32 1, %s7
  %s10 = scalar_select 0, %s9, %s7
  $region1: #{tpu_custom_call.1} parent=0
    #allocation3 [shape = 'u8[131072]{0}', space=vmem, size = 0x20000, scoped, tag = 'input window, operand 0']
    #allocation4 [shape = 's32[2]{0}', space=sflag, size = 0x8, scoped, tag = 'scoped memory for tpu_custom_call.1']
    #allocation5 [shape = 's32[2]{0}', space=sflag, size = 0x8, scoped, tag = 'scoped memory for tpu_custom_call.1']
    #allocation6 [shape = 'u8[65536]{0}', space=vmem, size = 0x10000, scoped, tag = 'input window, operand 1']
    #allocation7 [shape = 's32[2]{0}', space=sflag, size = 0x8, scoped, tag = 'scoped memory for tpu_custom_call.1']
    #allocation8 [shape = 'u8[262144]{0}', space=vmem, size = 0x40000, scoped, tag = 'input window, operand 2, single buffered']
    #allocation9 [shape = 'u8[65536]{0}', space=vmem, size = 0x10000, scoped, tag = 'input window, operand 3, single buffered']
    #allocation10 [shape = 's32[1]{0}', space=sflag, size = 0x4, scoped, tag = 'scoped memory for tpu_custom_call.1']
    #allocation11 [shape = 'u8[131072]{0}', space=vmem, size = 0x20000, scoped, tag = 'output window, operand 0']
    %11 = vsyncpa [#allocation4], 0
    %s12 = scalar_lea.sflag [#allocation4], 1
    %13 = vsyncpa %s12, 0
    %14 = vsyncpa [#allocation7], 0
    %s15 = scalar_lea.sflag [#allocation7], 1
    %16 = vsyncpa %s15, 0
    %17 = vsyncpa [#allocation10], 0
    %18 = vsyncpa [#allocation5], 0
    %s19 = scalar_lea.sflag [#allocation5], 1
    %20 = vsyncpa %s19, 0
    loop: start=0, step=1, limit=18
    $region2: #{tpu_custom_call.1} parent=1 // loop_pre_header
      _
    $region3: #{tpu_custom_call.1} parent=1 // loop_header
      %s22 = sphi 0, %s26
      %p23 = scmp.ge.s32.totalorder %s22, 18
      %s29 = sphi 0, %s41
      %s30 = sphi 0, %s37
      %s31 = sphi 0, %s29
      %s32 = sphi 0, %s30
      %s33 = sphi 0, %s31
      %s34 = sphi 0, %s32
      %s46 = sphi 0, %s48
      %s49 = sphi 0, %s46
      %s50 = sphi 0, %s49
      %s66 = sphi 0, %s50
      %s72 = sphi 0, %s74
      %s75 = sphi 0, %s72
      %s76 = sphi 0, %s75
      %s92 = sphi 0, %s76
      %s96 = sphi 0, %s96
      %s98 = sphi 0, %s96
      %s99 = sphi 0, %s98
      %s113 = sphi 0, %s99
      %s117 = sphi 0, %s117
      %s119 = sphi 0, %s117
      %s120 = sphi 0, %s119
      %s134 = sphi 0, %s120
      %s138 = sphi 0, %s138
      %s140 = sphi 0, %s138
      %s141 = sphi 0, %s140
      %s155 = sphi 0, %s141
      %s159 = sphi 0, %s159
      %s161 = sphi 0, %s159
      %s162 = sphi 0, %s161
      %s176 = sphi 0, %s162
      %s182 = sphi 0, %s184
      %s185 = sphi 0, %s182
      %s186 = sphi 0, %s185
      %s202 = sphi 0, %s186
    $region4: #{tpu_custom_call.1} parent=1 // loop_header_branch
      %25 = sbr.rel (%p23) target = $region8
    $region5: #{tpu_custom_call.1} parent=1 // loop_body
      %s27 = ssub.s32 %s22, 1
      %s28 = ssub.s32 %s22, 2
      %s35 = sadd.s32 1, %s30
      %p36 = scmp.ge.s32.totalorder %s35, 8
      %s37 = scalar_select %p36, 0, %s35
      %s38 = sadd.s32 1, %s29
      %s39 = scalar_select %p36, %s38, %s29
      %p40 = scmp.ge.s32.totalorder %s39, 2
      %s41 = scalar_select %p40, 0, %s39
      %s42 = ssub.s32 %s29, %s41
      %s43 = ssub.s32 %s30, %s37
      %s44 = sor.u32 %s42, %s43
      %p45 = scmp.eq.s32.totalorder %s44, 0
      %s47 = sadd.s32 %s46, 1
      %s48 = scalar_select %p45, %s46, %s47
      %p51 = pneg %p45
      %p52 = scmp.eq.s32.totalorder %s22, 15
      %p53 = por %p51, %p52
      %p54 = scmp.ne.s32.totalorder %s46, %s49
      %p55 = scmp.eq.s32.totalorder %s22, 0
      %p56 = por %p54, %p55
      %p57 = scmp.ne.s32.totalorder %s46, %s49
      %p58 = scmp.eq.s32.totalorder %s27, 15
      %p59 = por %p57, %p58
      %p60 = scmp.ne.s32.totalorder %s49, %s50
      %p61 = scmp.eq.s32.totalorder %s27, 0
      %p62 = por %p60, %p61
      %p63 = scmp.ne.s32.totalorder %s49, %s50
      %p64 = scmp.eq.s32.totalorder %s28, 15
      %p65 = por %p63, %p64
      %p67 = scmp.ne.s32.totalorder %s50, %s66
      %p68 = scmp.eq.s32.totalorder %s28, 0
      %p69 = por %p67, %p68
      %s70 = ssub.s32 %s30, %s37
      %p71 = scmp.eq.s32.totalorder %s70, 0
      %s73 = sadd.s32 %s72, 1
      %s74 = scalar_select %p71, %s72, %s73
      %p77 = pneg %p71
      %p78 = scmp.eq.s32.totalorder %s22, 15
      %p79 = por %p77, %p78
      %p80 = scmp.ne.s32.totalorder %s72, %s75
      %p81 = scmp.eq.s32.totalorder %s22, 0
      %p82 = por %p80, %p81
      %p83 = scmp.ne.s32.totalorder %s72, %s75
      %p84 = scmp.eq.s32.totalorder %s27, 15
      %p85 = por %p83, %p84
      %p86 = scmp.ne.s32.totalorder %s75, %s76
      %p87 = scmp.eq.s32.totalorder %s27, 0
      %p88 = por %p86, %p87
      %p89 = scmp.ne.s32.totalorder %s75, %s76
      %p90 = scmp.eq.s32.totalorder %s28, 15
      %p91 = por %p89, %p90
      %p93 = scmp.ne.s32.totalorder %s76, %s92
      %p94 = scmp.eq.s32.totalorder %s28, 0
      %p95 = por %p93, %p94
      %s97 = sadd.s32 %s96, 1
      %p100 = scmp.eq.s32.totalorder %s22, 15
      %p101 = scmp.ne.s32.totalorder %s96, %s98
      %p102 = scmp.eq.s32.totalorder %s22, 0
      %p103 = por %p101, %p102
      %p104 = scmp.ne.s32.totalorder %s96, %s98
      %p105 = scmp.eq.s32.totalorder %s27, 15
      %p106 = por %p104, %p105
      %p107 = scmp.ne.s32.totalorder %s98, %s99
      %p108 = scmp.eq.s32.totalorder %s27, 0
      %p109 = por %p107, %p108
      %p110 = scmp.ne.s32.totalorder %s98, %s99
      %p111 = scmp.eq.s32.totalorder %s28, 15
      %p112 = por %p110, %p111
      %p114 = scmp.ne.s32.totalorder %s99, %s113
      %p115 = scmp.eq.s32.totalorder %s28, 0
      %p116 = por %p114, %p115
      %s118 = sadd.s32 %s117, 1
      %p121 = scmp.eq.s32.totalorder %s22, 15
      %p122 = scmp.ne.s32.totalorder %s117, %s119
      %p123 = scmp.eq.s32.totalorder %s22, 0
      %p124 = por %p122, %p123
      %p125 = scmp.ne.s32.totalorder %s117, %s119
      %p126 = scmp.eq.s32.totalorder %s27, 15
      %p127 = por %p125, %p126
      %p128 = scmp.ne.s32.totalorder %s119, %s120
      %p129 = scmp.eq.s32.totalorder %s27, 0
      %p130 = por %p128, %p129
      %p131 = scmp.ne.s32.totalorder %s119, %s120
      %p132 = scmp.eq.s32.totalorder %s28, 15
      %p133 = por %p131, %p132
      %p135 = scmp.ne.s32.totalorder %s120, %s134
      %p136 = scmp.eq.s32.totalorder %s28, 0
      %p137 = por %p135, %p136
      %s139 = sadd.s32 %s138, 1
      %p142 = scmp.eq.s32.totalorder %s22, 15
      %p143 = scmp.ne.s32.totalorder %s138, %s140
      %p144 = scmp.eq.s32.totalorder %s22, 0
      %p145 = por %p143, %p144
      %p146 = scmp.ne.s32.totalorder %s138, %s140
      %p147 = scmp.eq.s32.totalorder %s27, 15
      %p148 = por %p146, %p147
      %p149 = scmp.ne.s32.totalorder %s140, %s141
      %p150 = scmp.eq.s32.totalorder %s27, 0
      %p151 = por %p149, %p150
      %p152 = scmp.ne.s32.totalorder %s140, %s141
      %p153 = scmp.eq.s32.totalorder %s28, 15
      %p154 = por %p152, %p153
      %p156 = scmp.ne.s32.totalorder %s141, %s155
      %p157 = scmp.eq.s32.totalorder %s28, 0
      %p158 = por %p156, %p157
      %s160 = sadd.s32 %s159, 1
      %p163 = scmp.eq.s32.totalorder %s22, 15
      %p164 = scmp.ne.s32.totalorder %s159, %s161
      %p165 = scmp.eq.s32.totalorder %s22, 0
      %p166 = por %p164, %p165
      %p167 = scmp.ne.s32.totalorder %s159, %s161
      %p168 = scmp.eq.s32.totalorder %s27, 15
      %p169 = por %p167, %p168
      %p170 = scmp.ne.s32.totalorder %s161, %s162
      %p171 = scmp.eq.s32.totalorder %s27, 0
      %p172 = por %p170, %p171
      %p173 = scmp.ne.s32.totalorder %s161, %s162
      %p174 = scmp.eq.s32.totalorder %s28, 15
      %p175 = por %p173, %p174
      %p177 = scmp.ne.s32.totalorder %s162, %s176
      %p178 = scmp.eq.s32.totalorder %s28, 0
      %p179 = por %p177, %p178
      %s180 = ssub.s32 %s29, %s41
      %p181 = scmp.eq.s32.totalorder %s180, 0
      %s183 = sadd.s32 %s182, 1
      %s184 = scalar_select %p181, %s182, %s183
      %p187 = pneg %p181
      %p188 = scmp.eq.s32.totalorder %s22, 15
      %p189 = por %p187, %p188
      %p190 = scmp.ne.s32.totalorder %s182, %s185
      %p191 = scmp.eq.s32.totalorder %s22, 0
      %p192 = por %p190, %p191
      %p193 = scmp.ne.s32.totalorder %s182, %s185
      %p194 = scmp.eq.s32.totalorder %s27, 15
      %p195 = por %p193, %p194
      %p196 = scmp.ne.s32.totalorder %s185, %s186
      %p197 = scmp.eq.s32.totalorder %s27, 0
      %p198 = por %p196, %p197
      %p199 = scmp.ne.s32.totalorder %s185, %s186
      %p200 = scmp.eq.s32.totalorder %s28, 15
      %p201 = por %p199, %p200
      %p203 = scmp.ne.s32.totalorder %s186, %s202
      %p204 = scmp.eq.s32.totalorder %s28, 0
      %p205 = por %p203, %p204
      %p206 = scmp.le.s32.totalorder 1, %s22
      %p207 = scmp.lt.s32.totalorder %s22, 17
      %p208 = pnand %p206, %p207
      %p209 = pneg %p208
      // Predicated region
      $region9: #{tpu_custom_call.1} parent=5 // pred_check
        _
      $region10: #{tpu_custom_call.1} parent=5 // pred_check_branch
        %211 = sbr.rel (%p208) target = $region12
      $region11: #{tpu_custom_call.1} parent=5 // pred_region
        %s212 = ssub.s32 %s22, 1
        // Predicated region
        $region13: #{tpu_custom_call.1} parent=11 // pred_check
          %p213 = pneg %p109
        $region14: #{tpu_custom_call.1} parent=11 // pred_check_branch
          %215 = sbr.rel (%p213) target = $region16
        $region15: #{tpu_custom_call.1} parent=11 // pred_region
          %s217 = ssub.s32 8192, 8192
          %218 = vsyncadd [#allocation7], %s217
          %s219 = sshll.u32 [#allocation8], 4
          %s220 = int_to_ptr.vmem [resolvable:$true] %s219
          %225 = dma.hbm_to_vmem [thread:$0]  %s2, 8192, %s220, [#allocation7], 256, 256, 16
        $region16: #{tpu_custom_call.1} parent=11 // pred_fallthru
          _
        // Predicated region
        $region17: #{tpu_custom_call.1} parent=11 // pred_check
          %p226 = pneg %p130
        $region18: #{tpu_custom_call.1} parent=11 // pred_check_branch
          %228 = sbr.rel (%p226) target = $region20
        $region19: #{tpu_custom_call.1} parent=11 // pred_region
          %s230 = ssub.s32 2048, 2048
          %231 = vsyncadd [#allocation10], %s230
          %s232 = sshll.u32 [#allocation9], 4
          %s233 = int_to_ptr.vmem [resolvable:$true] %s232
          %238 = dma.hbm_to_vmem [thread:$0]  %s3, 2048, %s233, [#allocation10], 256, 256, 16
        $region20: #{tpu_custom_call.1} parent=11 // pred_fallthru
          _
        // Predicated region
        $region21: #{tpu_custom_call.1} parent=11 // pred_check
          %p239 = pneg %p151
        $region22: #{tpu_custom_call.1} parent=11 // pred_check_branch
          %241 = sbr.rel (%p239) target = $region24
        $region23: #{tpu_custom_call.1} parent=11 // pred_region
          _
        $region24: #{tpu_custom_call.1} parent=11 // pred_fallthru
          _
        // Predicated region
        $region25: #{tpu_custom_call.1} parent=11 // pred_check
          %p242 = pneg %p172
        $region26: #{tpu_custom_call.1} parent=11 // pred_check_branch
          %244 = sbr.rel (%p242) target = $region28
        $region27: #{tpu_custom_call.1} parent=11 // pred_region
          _
        $region28: #{tpu_custom_call.1} parent=11 // pred_fallthru
          _
      $region12: #{tpu_custom_call.1} parent=5 // pred_fallthru
        _
      %p245 = scmp.lt.s32.totalorder %s22, 16
      // Predicated region
      $region29: #{tpu_custom_call.1} parent=5 // pred_check
        %p246 = pneg %p245
      $region30: #{tpu_custom_call.1} parent=5 // pred_check_branch
        %248 = sbr.rel (%p246) target = $region32
      $region31: #{tpu_custom_call.1} parent=5 // pred_region
        // Predicated region
        $region33: #{tpu_custom_call.1} parent=31 // pred_check
          %p249 = pneg %p56
        $region34: #{tpu_custom_call.1} parent=31 // pred_check_branch
          %251 = sbr.rel (%p249) target = $region36
        $region35: #{tpu_custom_call.1} parent=31 // pred_region
          %s252 = sand.u32 %s46, 1
          %s253 = scalar_lea.sflag [#allocation4], %s252
          %s254 = sand.u32 %s46, 1
          %s255 = smul.addr %s254, 128
          %s256 = scalar_lea.vmem [#allocation3], %s255
          %s257 = smul.u32 16, %s30
          %s259 = ssub.s32 2048, 2048
          %260 = vsyncadd %s253, %s259
          %s261 = smul.addr %s257, 2
          %s262 = smul.addr %s29, 256
          %s263 = sadd.s32 %s261, %s262
          %s264 = smul.addr %s263, 64
          %s265 = scalar_lea.hbm %s0, %s264
          %s266 = sshll.u32 %s256, 4
          %s267 = int_to_ptr.vmem [resolvable:$true] %s266
          %272 = dma.hbm_to_vmem [thread:$0]  %s265, 2048, %s267, %s253, 128, 128, 8
        $region36: #{tpu_custom_call.1} parent=31 // pred_fallthru
          _
        // Predicated region
        $region37: #{tpu_custom_call.1} parent=31 // pred_check
          %p273 = pneg %p82
        $region38: #{tpu_custom_call.1} parent=31 // pred_check_branch
          %275 = sbr.rel (%p273) target = $region40
        $region39: #{tpu_custom_call.1} parent=31 // pred_region
          %s276 = sand.u32 %s22, 1
          %s277 = scalar_lea.sflag [#allocation7], %s276
          %s278 = sand.u32 %s72, 1
          %s279 = smul.addr %s278, 64
          %s280 = scalar_lea.vmem [#allocation6], %s279
          %s282 = ssub.s32 1024, 1024
          %283 = vsyncadd %s277, %s282
          %s284 = smul.addr %s30, 128
          %s285 = scalar_lea.hbm %s1, %s284
          %s286 = sshll.u32 %s280, 4
          %s287 = int_to_ptr.vmem [resolvable:$true] %s286
          %292 = dma.hbm_to_vmem [thread:$0]  %s285, 1024, %s287, %s277, 1024, 128, 8
        $region40: #{tpu_custom_call.1} parent=31 // pred_fallthru
          _
      $region32: #{tpu_custom_call.1} parent=5 // pred_fallthru
        _
      %p293 = scmp.le.s32.totalorder 1, %s22
      %p294 = scmp.lt.s32.totalorder %s22, 17
      %p295 = pnand %p293, %p294
      %p296 = pneg %p295
      // Predicated region
      $region41: #{tpu_custom_call.1} parent=5 // pred_check
        _
      $region42: #{tpu_custom_call.1} parent=5 // pred_check_branch
        %298 = sbr.rel (%p295) target = $region44
      $region43: #{tpu_custom_call.1} parent=5 // pred_region
        %s299 = ssub.s32 %s22, 1
        %s300 = sand.u32 %s49, 1
        %s301 = scalar_lea.sflag [#allocation4], %s300
        %s302 = sand.u32 %s49, 1
        %s303 = smul.addr %s302, 128
        %s304 = scalar_lea.vmem [#allocation3], %s303
        // Predicated region
        $region45: #{tpu_custom_call.1} parent=43 // pred_check
          %p305 = pneg %p62
        $region46: #{tpu_custom_call.1} parent=43 // pred_check_branch
          %307 = sbr.rel (%p305) target = $region48
        $region47: #{tpu_custom_call.1} parent=43 // pred_region
          %308 = dma.done %s301, 2048
        $region48: #{tpu_custom_call.1} parent=43 // pred_fallthru
          _
        %s309 = sand.u32 %s27, 1
        %s310 = scalar_lea.sflag [#allocation7], %s309
        %s311 = sand.u32 %s75, 1
        %s312 = smul.addr %s311, 64
        %s313 = scalar_lea.vmem [#allocation6], %s312
        // Predicated region
        $region49: #{tpu_custom_call.1} parent=43 // pred_check
          %p314 = pneg %p88
        $region50: #{tpu_custom_call.1} parent=43 // pred_check_branch
          %316 = sbr.rel (%p314) target = $region52
        $region51: #{tpu_custom_call.1} parent=43 // pred_region
          %317 = dma.done %s310, 1024
        $region52: #{tpu_custom_call.1} parent=43 // pred_fallthru
          _
        // Predicated region
        $region53: #{tpu_custom_call.1} parent=43 // pred_check
          %p318 = pneg %p109
        $region54: #{tpu_custom_call.1} parent=43 // pred_check_branch
          %320 = sbr.rel (%p318) target = $region56
        $region55: #{tpu_custom_call.1} parent=43 // pred_region
          %321 = dma.done [#allocation7], 8192
        $region56: #{tpu_custom_call.1} parent=43 // pred_fallthru
          _
        // Predicated region
        $region57: #{tpu_custom_call.1} parent=43 // pred_check
          %p322 = pneg %p130
        $region58: #{tpu_custom_call.1} parent=43 // pred_check_branch
          %324 = sbr.rel (%p322) target = $region60
        $region59: #{tpu_custom_call.1} parent=43 // pred_region
          %325 = dma.done [#allocation10], 2048
        $region60: #{tpu_custom_call.1} parent=43 // pred_fallthru
          _
        %s326 = sand.u32 %s49, 1
        %s327 = scalar_lea.sflag [#allocation4], %s326
        %s328 = sand.u32 %s49, 1
        %s329 = smul.addr %s328, 128
        %s330 = scalar_lea.vmem [#allocation3], %s329
        %p331 = pneg %p62
        %p332 = pneg %p59
        %s333 = sand.u32 %s27, 1
        %s334 = scalar_lea.sflag [#allocation7], %s333
        %s335 = sand.u32 %s75, 1
        %s336 = smul.addr %s335, 64
        %s337 = scalar_lea.vmem [#allocation6], %s336
        %p338 = pneg %p88
        %p339 = pneg %p85
        %p340 = pneg %p109
        %p341 = pneg %p106
        %p342 = pneg %p130
        %p343 = pneg %p127
        %p344 = pneg %p151
        %p345 = pneg %p148
        %p346 = pneg %p172
        %p347 = pneg %p169
        %p348 = pneg %p198
        %p349 = pneg %p195
        %s350 = sand.u32 %s185, 1
        %s351 = scalar_lea.sflag [#allocation5], %s350
        %s352 = sand.u32 %s185, 1
        %s353 = smul.addr %s352, 128
        %s354 = scalar_lea.vmem [#allocation11], %s353
        %s355 = smul.u32 16, %s32
        %p356 = scmp.eq.s32.totalorder %s32, 0
        // Predicated region
        $region61: #{tpu_custom_call.1} parent=43 // pred_check
          %p357 = pneg %p356
        $region62: #{tpu_custom_call.1} parent=43 // pred_check_branch
          %359 = sbr.rel (%p357) target = $region64
        $region63: #{tpu_custom_call.1} parent=43 // pred_region
          %360 = vst [vmem:[#allocation2] sm:$0xff] 0.0
          %361 = vst [vmem:[#allocation2 + $0x8] sm:$0xff] 0.0
          %362 = vst [vmem:[#allocation2 + $0x10] sm:$0xff] 0.0
          %363 = vst [vmem:[#allocation2 + $0x18] sm:$0xff] 0.0
          %364 = vst [vmem:[#allocation2 + $0x20] sm:$0xff] 0.0
          %365 = vst [vmem:[#allocation2 + $0x28] sm:$0xff] 0.0
          %366 = vst [vmem:[#allocation2 + $0x30] sm:$0xff] 0.0
          %367 = vst [vmem:[#allocation2 + $0x38] sm:$0xff] 0.0
          %368 = vst [vmem:[#allocation2 + $0x40] sm:$0xff] 0.0
          %369 = vst [vmem:[#allocation2 + $0x48] sm:$0xff] 0.0
          %370 = vst [vmem:[#allocation2 + $0x50] sm:$0xff] 0.0
          %371 = vst [vmem:[#allocation2 + $0x58] sm:$0xff] 0.0
          %372 = vst [vmem:[#allocation2 + $0x60] sm:$0xff] 0.0
          %373 = vst [vmem:[#allocation2 + $0x68] sm:$0xff] 0.0
          %374 = vst [vmem:[#allocation2 + $0x70] sm:$0xff] 0.0
          %375 = vst [vmem:[#allocation2 + $0x78] sm:$0xff] 0.0
        $region64: #{tpu_custom_call.1} parent=43 // pred_fallthru
          _
        %v376 = vld [vmem:[#allocation2] sm:$0xff]
        %v377 = vld [vmem:[#allocation2 + $0x8] sm:$0xff]
        %v378 = vld [vmem:[#allocation2 + $0x10] sm:$0xff]
        %v379 = vld [vmem:[#allocation2 + $0x18] sm:$0xff]
        %v380 = vld [vmem:[#allocation2 + $0x20] sm:$0xff]
        %v381 = vld [vmem:[#allocation2 + $0x28] sm:$0xff]
        %v382 = vld [vmem:[#allocation2 + $0x30] sm:$0xff]
        %v383 = vld [vmem:[#allocation2 + $0x38] sm:$0xff]
        %v384 = vld [vmem:[#allocation2 + $0x40] sm:$0xff]
        %v385 = vld [vmem:[#allocation2 + $0x48] sm:$0xff]
        %v386 = vld [vmem:[#allocation2 + $0x50] sm:$0xff]
        %v387 = vld [vmem:[#allocation2 + $0x58] sm:$0xff]
        %v388 = vld [vmem:[#allocation2 + $0x60] sm:$0xff]
        %v389 = vld [vmem:[#allocation2 + $0x68] sm:$0xff]
        %v390 = vld [vmem:[#allocation2 + $0x70] sm:$0xff]
        %v391 = vld [vmem:[#allocation2 + $0x78] sm:$0xff]
        %v392 = vld [vmem:[%s313] sm:$0xff]
        %v393 = vld [vmem:[%s313 + $0x8] sm:$0xff]
        %v394 = vld [vmem:[%s313 + $0x10] sm:$0xff]
        %v395 = vld [vmem:[%s313 + $0x18] sm:$0xff]
        %v396 = vld [vmem:[%s313 + $0x20] sm:$0xff]
        %v397 = vld [vmem:[%s313 + $0x28] sm:$0xff]
        %v398 = vld [vmem:[%s313 + $0x30] sm:$0xff]
        %v399 = vld [vmem:[%s313 + $0x38] sm:$0xff]
        %v400 = vld [vmem:[%s304] sm:$0xff]
        %v401 = vld [vmem:[%s304 + $0x8] sm:$0xff]
        %v402 = vld [vmem:[%s304 + $0x10] sm:$0xff]
        %v403 = vld [vmem:[%s304 + $0x18] sm:$0xff]
        %v404 = vld [vmem:[%s304 + $0x20] sm:$0xff]
        %v405 = vld [vmem:[%s304 + $0x28] sm:$0xff]
        %v406 = vld [vmem:[%s304 + $0x30] sm:$0xff]
        %v407 = vld [vmem:[%s304 + $0x38] sm:$0xff]
        %v408 = vld [vmem:[%s304 + $0x40] sm:$0xff]
        %v409 = vld [vmem:[%s304 + $0x48] sm:$0xff]
        %v410 = vld [vmem:[%s304 + $0x50] sm:$0xff]
        %v411 = vld [vmem:[%s304 + $0x58] sm:$0xff]
        %v412 = vld [vmem:[%s304 + $0x60] sm:$0xff]
        %v413 = vld [vmem:[%s304 + $0x68] sm:$0xff]
        %v414 = vld [vmem:[%s304 + $0x70] sm:$0xff]
        %v415 = vld [vmem:[%s304 + $0x78] sm:$0xff]
        %v416 = vunpack.c.l.bf16 %v400
        %v417 = vunpack.c.h.bf16 %v400
        %v418 = vunpack.c.l.bf16 %v401
        %v419 = vunpack.c.h.bf16 %v401
        %v420 = vunpack.c.l.bf16 %v402
        %v421 = vunpack.c.h.bf16 %v402
        %v422 = vunpack.c.l.bf16 %v403
        %v423 = vunpack.c.h.bf16 %v403
        %v424 = vunpack.c.l.bf16 %v404
        %v425 = vunpack.c.h.bf16 %v404
        %v426 = vunpack.c.l.bf16 %v405
        %v427 = vunpack.c.h.bf16 %v405
        %v428 = vunpack.c.l.bf16 %v406
        %v429 = vunpack.c.h.bf16 %v406
        %v430 = vunpack.c.l.bf16 %v407
        %v431 = vunpack.c.h.bf16 %v407
        %v432 = vunpack.c.l.bf16 %v408
        %v433 = vunpack.c.h.bf16 %v408
        %v434 = vunpack.c.l.bf16 %v409
        %v435 = vunpack.c.h.bf16 %v409
        %v436 = vunpack.c.l.bf16 %v410
        %v437 = vunpack.c.h.bf16 %v410
        %v438 = vunpack.c.l.bf16 %v411
        %v439 = vunpack.c.h.bf16 %v411
        %v440 = vunpack.c.l.bf16 %v412
        %v441 = vunpack.c.h.bf16 %v412
        %v442 = vunpack.c.l.bf16 %v413
        %v443 = vunpack.c.h.bf16 %v413
        %v444 = vunpack.c.l.bf16 %v414
        %v445 = vunpack.c.h.bf16 %v414
        %v446 = vunpack.c.l.bf16 %v415
        %v447 = vunpack.c.h.bf16 %v415
        %448 = vmatprep.subr.mxu0 %v417
        %449 = vmatpush1.msra.mxu0 %v416
        %450 = vmatprep.subr.mxu0 %v419
        %451 = vmatpush1.msra.mxu0 %v418
        %452 = vmatprep.subr.mxu0 %v421
        %453 = vmatpush1.msra.mxu0 %v420
        %454 = vmatprep.subr.mxu0 %v423
        %455 = vmatpush1.msra.mxu0 %v422
        %456 = vmatprep.subr.mxu0 %v425
        %457 = vmatpush1.msra.mxu0 %v424
        %458 = vmatprep.subr.mxu0 %v427
        %459 = vmatpush1.msra.mxu0 %v426
        %460 = vmatprep.subr.mxu0 %v429
        %461 = vmatpush1.msra.mxu0 %v428
        %462 = vmatprep.subr.mxu0 %v431
        %463 = vmatpush1.msra.mxu0 %v430
        %464 = vmatprep.subr.mxu0 %v433
        %465 = vmatpush1.msra.mxu0 %v432
        %466 = vmatprep.subr.mxu0 %v435
        %467 = vmatpush1.msra.mxu0 %v434
        %468 = vmatprep.subr.mxu0 %v437
        %469 = vmatpush1.msra.mxu0 %v436
        %470 = vmatprep.subr.mxu0 %v439
        %471 = vmatpush1.msra.mxu0 %v438
        %472 = vmatprep.subr.mxu0 %v441
        %473 = vmatpush1.msra.mxu0 %v440
        %474 = vmatprep.subr.mxu0 %v443
        %475 = vmatpush1.msra.mxu0 %v442
        %476 = vmatprep.subr.mxu0 %v445
        %477 = vmatpush1.msra.mxu0 %v444
        %478 = vmatprep.subr.mxu0 %v447
        %479 = vmatpush1.msra.mxu0 %v446
        %480 = vmatprep.subr.mxu0 0.0
        %481 = vmatpush1.msra.mxu0 0.0
        %482 = vmatprep.subr.mxu0 0.0
        %483 = vmatpush1.msra.mxu0 0.0
        %484 = vmatprep.subr.mxu0 0.0
        %485 = vmatpush1.msra.mxu0 0.0
        %486 = vmatprep.subr.mxu0 0.0
        %487 = vmatpush1.msra.mxu0 0.0
        %488 = vmatprep.subr.mxu0 0.0
        %489 = vmatpush1.msra.mxu0 0.0
        %490 = vmatprep.subr.mxu0 0.0
        %491 = vmatpush1.msra.mxu0 0.0
        %492 = vmatprep.subr.mxu0 0.0
        %493 = vmatpush1.msra.mxu0 0.0
        %494 = vmatprep.subr.mxu0 0.0
        %495 = vmatpush1.msra.mxu0 0.0
        %496 = vmatprep.subr.mxu0 0.0
        %497 = vmatpush1.msra.mxu0 0.0
        %498 = vmatprep.subr.mxu0 0.0
        %499 = vmatpush1.msra.mxu0 0.0
        %500 = vmatprep.subr.mxu0 0.0
        %501 = vmatpush1.msra.mxu0 0.0
        %502 = vmatprep.subr.mxu0 0.0
        %503 = vmatpush1.msra.mxu0 0.0
        %504 = vmatprep.subr.mxu0 0.0
        %505 = vmatpush1.msra.mxu0 0.0
        %506 = vmatprep.subr.mxu0 0.0
        %507 = vmatpush1.msra.mxu0 0.0
        %508 = vmatprep.subr.mxu0 0.0
        %509 = vmatpush1.msra.mxu0 0.0
        %510 = vmatprep.subr.mxu0 0.0
        %511 = vmatpush1.msra.mxu0 0.0
        %512 = vmatprep.mubr.f32.mxu0 0.0
        %513 = vmatmul.mubr.f32.gmra.mrb[0].mxu0 %v392
        %v514 = vpop.f32.mrb[0].mxu0
        %v515 = vadd.f32 0.0, %v514
        %v516 = vpop.f32.mrb[0].mxu0
        %v517 = vadd.f32 0.0, %v516
        %518 = vmatprep.mubr.f32.mxu0 0.0
        %519 = vmatmul.mubr.f32.gmra.mrb[0].mxu0 %v393
        %v520 = vpop.f32.mrb[0].mxu0
        %v521 = vadd.f32 0.0, %v520
        %v522 = vpop.f32.mrb[0].mxu0
        %v523 = vadd.f32 0.0, %v522
        %524 = vmatprep.mubr.f32.mxu0 0.0
        %525 = vmatmul.mubr.f32.gmra.mrb[0].mxu0 %v394
        %v526 = vpop.f32.mrb[0].mxu0
        %v527 = vadd.f32 0.0, %v526
        %v528 = vpop.f32.mrb[0].mxu0
        %v529 = vadd.f32 0.0, %v528
        %530 = vmatprep.mubr.f32.mxu0 0.0
        %531 = vmatmul.mubr.f32.gmra.mrb[0].mxu0 %v395
        %v532 = vpop.f32.mrb[0].mxu0
        %v533 = vadd.f32 0.0, %v532
        %v534 = vpop.f32.mrb[0].mxu0
        %v535 = vadd.f32 0.0, %v534
        %536 = vmatprep.mubr.f32.mxu0 0.0
        %537 = vmatmul.mubr.f32.gmra.mrb[0].mxu0 %v396
        %v538 = vpop.f32.mrb[0].mxu0
        %v539 = vadd.f32 0.0, %v538
        %v540 = vpop.f32.mrb[0].mxu0
        %v541 = vadd.f32 0.0, %v540
        %542 = vmatprep.mubr.f32.mxu0 0.0
        %543 = vmatmul.mubr.f32.gmra.mrb[0].mxu0 %v397
        %v544 = vpop.f32.mrb[0].mxu0
        %v545 = vadd.f32 0.0, %v544
        %v546 = vpop.f32.mrb[0].mxu0
        %v547 = vadd.f32 0.0, %v546
        %548 = vmatprep.mubr.f32.mxu0 0.0
        %549 = vmatmul.mubr.f32.gmra.mrb[0].mxu0 %v398
        %v550 = vpop.f32.mrb[0].mxu0
        %v551 = vadd.f32 0.0, %v550
        %v552 = vpop.f32.mrb[0].mxu0
        %v553 = vadd.f32 0.0, %v552
        %554 = vmatprep.mubr.f32.mxu0 0.0
        %555 = vmatmul.mubr.f32.gmra.mrb[0].mxu0 %v399
        %v556 = vpop.f32.mrb[0].mxu0
        %v557 = vadd.f32 0.0, %v556
        %v558 = vpop.f32.mrb[0].mxu0
        %v559 = vadd.f32 0.0, %v558
        %560 = vdwg.mxu0
        %v561 = vadd.f32 %v376, %v515
        %v562 = vadd.f32 %v377, %v517
        %v563 = vadd.f32 %v378, %v521
        %v564 = vadd.f32 %v379, %v523
        %v565 = vadd.f32 %v380, %v527
        %v566 = vadd.f32 %v381, %v529
        %v567 = vadd.f32 %v382, %v533
        %v568 = vadd.f32 %v383, %v535
        %v569 = vadd.f32 %v384, %v539
        %v570 = vadd.f32 %v385, %v541
        %v571 = vadd.f32 %v386, %v545
        %v572 = vadd.f32 %v387, %v547
        %v573 = vadd.f32 %v388, %v551
        %v574 = vadd.f32 %v389, %v553
        %v575 = vadd.f32 %v390, %v557
        %v576 = vadd.f32 %v391, %v559
        %577 = vst [vmem:[#allocation2] sm:$0xff] %v561
        %578 = vst [vmem:[#allocation2 + $0x8] sm:$0xff] %v562
        %579 = vst [vmem:[#allocation2 + $0x10] sm:$0xff] %v563
        %580 = vst [vmem:[#allocation2 + $0x18] sm:$0xff] %v564
        %581 = vst [vmem:[#allocation2 + $0x20] sm:$0xff] %v565
        %582 = vst [vmem:[#allocation2 + $0x28] sm:$0xff] %v566
        %583 = vst [vmem:[#allocation2 + $0x30] sm:$0xff] %v567
        %584 = vst [vmem:[#allocation2 + $0x38] sm:$0xff] %v568
        %585 = vst [vmem:[#allocation2 + $0x40] sm:$0xff] %v569
        %586 = vst [vmem:[#allocation2 + $0x48] sm:$0xff] %v570
        %587 = vst [vmem:[#allocation2 + $0x50] sm:$0xff] %v571
        %588 = vst [vmem:[#allocation2 + $0x58] sm:$0xff] %v572
        %589 = vst [vmem:[#allocation2 + $0x60] sm:$0xff] %v573
        %590 = vst [vmem:[#allocation2 + $0x68] sm:$0xff] %v574
        %591 = vst [vmem:[#allocation2 + $0x70] sm:$0xff] %v575
        %592 = vst [vmem:[#allocation2 + $0x78] sm:$0xff] %v576
        %p593 = scmp.eq.s32.totalorder %s32, 7
        // Predicated region
        $region65: #{tpu_custom_call.1} parent=43 // pred_check
          %p594 = pneg %p593
        $region66: #{tpu_custom_call.1} parent=43 // pred_check_branch
          %596 = sbr.rel (%p594) target = $region68
        $region67: #{tpu_custom_call.1} parent=43 // pred_region
          %v597 = vld [vmem:[#allocation2] sm:$0xff]
          %v598 = vld [vmem:[#allocation2 + $0x8] sm:$0xff]
          %v599 = vld [vmem:[#allocation2 + $0x10] sm:$0xff]
          %v600 = vld [vmem:[#allocation2 + $0x18] sm:$0xff]
          %v601 = vld [vmem:[#allocation2 + $0x20] sm:$0xff]
          %v602 = vld [vmem:[#allocation2 + $0x28] sm:$0xff]
          %v603 = vld [vmem:[#allocation2 + $0x30] sm:$0xff]
          %v604 = vld [vmem:[#allocation2 + $0x38] sm:$0xff]
          %v605 = vld [vmem:[#allocation2 + $0x40] sm:$0xff]
          %v606 = vld [vmem:[#allocation2 + $0x48] sm:$0xff]
          %v607 = vld [vmem:[#allocation2 + $0x50] sm:$0xff]
          %v608 = vld [vmem:[#allocation2 + $0x58] sm:$0xff]
          %v609 = vld [vmem:[#allocation2 + $0x60] sm:$0xff]
          %v610 = vld [vmem:[#allocation2 + $0x68] sm:$0xff]
          %v611 = vld [vmem:[#allocation2 + $0x70] sm:$0xff]
          %v612 = vld [vmem:[#allocation2 + $0x78] sm:$0xff]
          %v613 = vld [vmem:[#allocation8] sm:$0xff]
          %v614 = vld [vmem:[#allocation8 + $0x8] sm:$0xff]
          %v615 = vld [vmem:[#allocation8 + $0x10] sm:$0xff]
          %v616 = vld [vmem:[#allocation8 + $0x18] sm:$0xff]
          %v617 = vld [vmem:[#allocation8 + $0x20] sm:$0xff]
          %v618 = vld [vmem:[#allocation8 + $0x28] sm:$0xff]
          %v619 = vld [vmem:[#allocation8 + $0x30] sm:$0xff]
          %v620 = vld [vmem:[#allocation8 + $0x38] sm:$0xff]
          %v621 = vld [vmem:[#allocation8 + $0x40] sm:$0xff]
          %v622 = vld [vmem:[#allocation8 + $0x48] sm:$0xff]
          %v623 = vld [vmem:[#allocation8 + $0x50] sm:$0xff]
          %v624 = vld [vmem:[#allocation8 + $0x58] sm:$0xff]
          %v625 = vld [vmem:[#allocation8 + $0x60] sm:$0xff]
          %v626 = vld [vmem:[#allocation8 + $0x68] sm:$0xff]
          %v627 = vld [vmem:[#allocation8 + $0x70] sm:$0xff]
          %v628 = vld [vmem:[#allocation8 + $0x78] sm:$0xff]
          %v629 = vld [vmem:[#allocation8 + $0x80] sm:$0xff]
          %v630 = vld [vmem:[#allocation8 + $0x88] sm:$0xff]
          %v631 = vld [vmem:[#allocation8 + $0x90] sm:$0xff]
          %v632 = vld [vmem:[#allocation8 + $0x98] sm:$0xff]
          %v633 = vld [vmem:[#allocation8 + $0xa0] sm:$0xff]
          %v634 = vld [vmem:[#allocation8 + $0xa8] sm:$0xff]
          %v635 = vld [vmem:[#allocation8 + $0xb0] sm:$0xff]
          %v636 = vld [vmem:[#allocation8 + $0xb8] sm:$0xff]
          %v637 = vld [vmem:[#allocation8 + $0xc0] sm:$0xff]
          %v638 = vld [vmem:[#allocation8 + $0xc8] sm:$0xff]
          %v639 = vld [vmem:[#allocation8 + $0xd0] sm:$0xff]
          %v640 = vld [vmem:[#allocation8 + $0xd8] sm:$0xff]
          %v641 = vld [vmem:[#allocation8 + $0xe0] sm:$0xff]
          %v642 = vld [vmem:[#allocation8 + $0xe8] sm:$0xff]
          %v643 = vld [vmem:[#allocation8 + $0xf0] sm:$0xff]
          %v644 = vld [vmem:[#allocation8 + $0xf8] sm:$0xff]
          %v645 = vld [vmem:[#allocation8 + $0x100] sm:$0xff]
          %v646 = vld [vmem:[#allocation8 + $0x108] sm:$0xff]
          %v647 = vld [vmem:[#allocation8 + $0x110] sm:$0xff]
          %v648 = vld [vmem:[#allocation8 + $0x118] sm:$0xff]
          %v649 = vld [vmem:[#allocation8 + $0x120] sm:$0xff]
          %v650 = vld [vmem:[#allocation8 + $0x128] sm:$0xff]
          %v651 = vld [vmem:[#allocation8 + $0x130] sm:$0xff]
          %v652 = vld [vmem:[#allocation8 + $0x138] sm:$0xff]
          %v653 = vld [vmem:[#allocation8 + $0x140] sm:$0xff]
          %v654 = vld [vmem:[#allocation8 + $0x148] sm:$0xff]
          %v655 = vld [vmem:[#allocation8 + $0x150] sm:$0xff]
          %v656 = vld [vmem:[#allocation8 + $0x158] sm:$0xff]
          %v657 = vld [vmem:[#allocation8 + $0x160] sm:$0xff]
          %v658 = vld [vmem:[#allocation8 + $0x168] sm:$0xff]
          %v659 = vld [vmem:[#allocation8 + $0x170] sm:$0xff]
          %v660 = vld [vmem:[#allocation8 + $0x178] sm:$0xff]
          %v661 = vld [vmem:[#allocation8 + $0x180] sm:$0xff]
          %v662 = vld [vmem:[#allocation8 + $0x188] sm:$0xff]
          %v663 = vld [vmem:[#allocation8 + $0x190] sm:$0xff]
          %v664 = vld [vmem:[#allocation8 + $0x198] sm:$0xff]
          %v665 = vld [vmem:[#allocation8 + $0x1a0] sm:$0xff]
          %v666 = vld [vmem:[#allocation8 + $0x1a8] sm:$0xff]
          %v667 = vld [vmem:[#allocation8 + $0x1b0] sm:$0xff]
          %v668 = vld [vmem:[#allocation8 + $0x1b8] sm:$0xff]
          %v669 = vld [vmem:[#allocation8 + $0x1c0] sm:$0xff]
          %v670 = vld [vmem:[#allocation8 + $0x1c8] sm:$0xff]
          %v671 = vld [vmem:[#allocation8 + $0x1d0] sm:$0xff]
          %v672 = vld [vmem:[#allocation8 + $0x1d8] sm:$0xff]
          %v673 = vld [vmem:[#allocation8 + $0x1e0] sm:$0xff]
          %v674 = vld [vmem:[#allocation8 + $0x1e8] sm:$0xff]
          %v675 = vld [vmem:[#allocation8 + $0x1f0] sm:$0xff]
          %v676 = vld [vmem:[#allocation8 + $0x1f8] sm:$0xff]
          %677 = vmatprep.subr.mxu0 %v614
          %678 = vmatpush1.msra.mxu0 %v613
          %679 = vmatprep.subr.mxu0 %v616
          %680 = vmatpush1.msra.mxu0 %v615
          %681 = vmatprep.subr.mxu0 %v618
          %682 = vmatpush1.msra.mxu0 %v617
          %683 = vmatprep.subr.mxu0 %v620
          %684 = vmatpush1.msra.mxu0 %v619
          %685 = vmatprep.subr.mxu0 %v622
          %686 = vmatpush1.msra.mxu0 %v621
          %687 = vmatprep.subr.mxu0 %v624
          %688 = vmatpush1.msra.mxu0 %v623
          %689 = vmatprep.subr.mxu0 %v626
          %690 = vmatpush1.msra.mxu0 %v625
          %691 = vmatprep.subr.mxu0 %v628
          %692 = vmatpush1.msra.mxu0 %v627
          %693 = vmatprep.subr.mxu0 %v630
          %694 = vmatpush1.msra.mxu0 %v629
          %695 = vmatprep.subr.mxu0 %v632
          %696 = vmatpush1.msra.mxu0 %v631
          %697 = vmatprep.subr.mxu0 %v634
          %698 = vmatpush1.msra.mxu0 %v633
          %699 = vmatprep.subr.mxu0 %v636
          %700 = vmatpush1.msra.mxu0 %v635
          %701 = vmatprep.subr.mxu0 %v638
          %702 = vmatpush1.msra.mxu0 %v637
          %703 = vmatprep.subr.mxu0 %v640
          %704 = vmatpush1.msra.mxu0 %v639
          %705 = vmatprep.subr.mxu0 %v642
          %706 = vmatpush1.msra.mxu0 %v641
          %707 = vmatprep.subr.mxu0 %v644
          %708 = vmatpush1.msra.mxu0 %v643
          %709 = vmatprep.subr.mxu0 %v646
          %710 = vmatpush1.msra.mxu0 %v645
          %711 = vmatprep.subr.mxu0 %v648
          %712 = vmatpush1.msra.mxu0 %v647
          %713 = vmatprep.subr.mxu0 %v650
          %714 = vmatpush1.msra.mxu0 %v649
          %715 = vmatprep.subr.mxu0 %v652
          %716 = vmatpush1.msra.mxu0 %v651
          %717 = vmatprep.subr.mxu0 %v654
          %718 = vmatpush1.msra.mxu0 %v653
          %719 = vmatprep.subr.mxu0 %v656
          %720 = vmatpush1.msra.mxu0 %v655
          %721 = vmatprep.subr.mxu0 %v658
          %722 = vmatpush1.msra.mxu0 %v657
          %723 = vmatprep.subr.mxu0 %v660
          %724 = vmatpush1.msra.mxu0 %v659
          %725 = vmatprep.subr.mxu0 %v662
          %726 = vmatpush1.msra.mxu0 %v661
          %727 = vmatprep.subr.mxu0 %v664
          %728 = vmatpush1.msra.mxu0 %v663
          %729 = vmatprep.subr.mxu0 %v666
          %730 = vmatpush1.msra.mxu0 %v665
          %731 = vmatprep.subr.mxu0 %v668
          %732 = vmatpush1.msra.mxu0 %v667
          %733 = vmatprep.subr.mxu0 %v670
          %734 = vmatpush1.msra.mxu0 %v669
          %735 = vmatprep.subr.mxu0 %v672
          %736 = vmatpush1.msra.mxu0 %v671
          %737 = vmatprep.subr.mxu0 %v674
          %738 = vmatpush1.msra.mxu0 %v673
          %739 = vmatprep.subr.mxu0 %v676
          %740 = vmatpush1.msra.mxu0 %v675
          %741 = vmatprep.mubr.f32.mxu0 %v598
          %742 = vmatmul.mubr.f32.gmra.mrb[0].mxu0 %v597
          %v743 = vpop.f32.mrb[0].mxu0
          %v744 = vadd.f32 0.0, %v743
          %v745 = vpop.f32.mrb[0].mxu0
          %v746 = vadd.f32 0.0, %v745
          %747 = vmatprep.mubr.f32.mxu0 %v600
          %748 = vmatmul.mubr.f32.gmra.mrb[0].mxu0 %v599
          %v749 = vpop.f32.mrb[0].mxu0
          %v750 = vadd.f32 0.0, %v749
          %v751 = vpop.f32.mrb[0].mxu0
          %v752 = vadd.f32 0.0, %v751
          %753 = vmatprep.mubr.f32.mxu0 %v602
          %754 = vmatmul.mubr.f32.gmra.mrb[0].mxu0 %v601
          %v755 = vpop.f32.mrb[0].mxu0
          %v756 = vadd.f32 0.0, %v755
          %v757 = vpop.f32.mrb[0].mxu0
          %v758 = vadd.f32 0.0, %v757
          %759 = vmatprep.mubr.f32.mxu0 %v604
          %760 = vmatmul.mubr.f32.gmra.mrb[0].mxu0 %v603
          %v761 = vpop.f32.mrb[0].mxu0
          %v762 = vadd.f32 0.0, %v761
          %v763 = vpop.f32.mrb[0].mxu0
          %v764 = vadd.f32 0.0, %v763
          %765 = vmatprep.mubr.f32.mxu0 %v606
          %766 = vmatmul.mubr.f32.gmra.mrb[0].mxu0 %v605
          %v767 = vpop.f32.mrb[0].mxu0
          %v768 = vadd.f32 0.0, %v767
          %v769 = vpop.f32.mrb[0].mxu0
          %v770 = vadd.f32 0.0, %v769
          %771 = vmatprep.mubr.f32.mxu0 %v608
          %772 = vmatmul.mubr.f32.gmra.mrb[0].mxu0 %v607
          %v773 = vpop.f32.mrb[0].mxu0
          %v774 = vadd.f32 0.0, %v773
          %v775 = vpop.f32.mrb[0].mxu0
          %v776 = vadd.f32 0.0, %v775
          %777 = vmatprep.mubr.f32.mxu0 %v610
          %778 = vmatmul.mubr.f32.gmra.mrb[0].mxu0 %v609
          %v779 = vpop.f32.mrb[0].mxu0
          %v780 = vadd.f32 0.0, %v779
          %v781 = vpop.f32.mrb[0].mxu0
          %v782 = vadd.f32 0.0, %v781
          %783 = vmatprep.mubr.f32.mxu0 %v612
          %784 = vmatmul.mubr.f32.gmra.mrb[0].mxu0 %v611
          %v785 = vpop.f32.mrb[0].mxu0
          %v786 = vadd.f32 0.0, %v785
          %v787 = vpop.f32.mrb[0].mxu0
          %v788 = vadd.f32 0.0, %v787
          %789 = vdwg.mxu0
          %v790 = vld [vmem:[%s4] sm:$0x3]
          %v792 = vlaneseq
          %v793 = vshrl.u32 %v792, 7
          %v794 = vsub.s32 0, %v793
          %v795 = vrot.slane %v790, %v794
          %v796 = vlaneseq
          %v797 = vshrl.u32 %v796, 7
          %v798 = vsub.s32 1, %v797
          %v799 = vrot.slane %v790, %v798
          %v802 = vmul.f32 %v744, %v795
          %v803 = vmul.f32 %v746, %v799
          %v804 = vmul.f32 %v750, %v795
          %v805 = vmul.f32 %v752, %v799
          %v806 = vmul.f32 %v756, %v795
          %v807 = vmul.f32 %v758, %v799
          %v808 = vmul.f32 %v762, %v795
          %v809 = vmul.f32 %v764, %v799
          %v810 = vmul.f32 %v768, %v795
          %v811 = vmul.f32 %v770, %v799
          %v812 = vmul.f32 %v774, %v795
          %v813 = vmul.f32 %v776, %v799
          %v814 = vmul.f32 %v780, %v795
          %v815 = vmul.f32 %v782, %v799
          %v816 = vmul.f32 %v786, %v795
          %v817 = vmul.f32 %v788, %v799
          %v818 = vld [vmem:[%s5] sm:$0x3]
          %v820 = vlaneseq
          %v821 = vshrl.u32 %v820, 7
          %v822 = vsub.s32 0, %v821
          %v823 = vrot.slane %v818, %v822
          %v824 = vlaneseq
          %v825 = vshrl.u32 %v824, 7
          %v826 = vsub.s32 1, %v825
          %v827 = vrot.slane %v818, %v826
          %v830 = vadd.f32 %v802, %v823
          %v831 = vadd.f32 %v803, %v827
          %v832 = vadd.f32 %v804, %v823
          %v833 = vadd.f32 %v805, %v827
          %v834 = vadd.f32 %v806, %v823
          %v835 = vadd.f32 %v807, %v827
          %v836 = vadd.f32 %v808, %v823
          %v837 = vadd.f32 %v809, %v827
          %v838 = vadd.f32 %v810, %v823
          %v839 = vadd.f32 %v811, %v827
          %v840 = vadd.f32 %v812, %v823
          %v841 = vadd.f32 %v813, %v827
          %v842 = vadd.f32 %v814, %v823
          %v843 = vadd.f32 %v815, %v827
          %v844 = vadd.f32 %v816, %v823
          %v845 = vadd.f32 %v817, %v827
          %v846 = vmax.f32 %v830, 0.0
          %v847 = vmax.f32 %v831, 0.0
          %v848 = vmax.f32 %v832, 0.0
          %v849 = vmax.f32 %v833, 0.0
          %v850 = vmax.f32 %v834, 0.0
          %v851 = vmax.f32 %v835, 0.0
          %v852 = vmax.f32 %v836, 0.0
          %v853 = vmax.f32 %v837, 0.0
          %v854 = vmax.f32 %v838, 0.0
          %v855 = vmax.f32 %v839, 0.0
          %v856 = vmax.f32 %v840, 0.0
          %v857 = vmax.f32 %v841, 0.0
          %v858 = vmax.f32 %v842, 0.0
          %v859 = vmax.f32 %v843, 0.0
          %v860 = vmax.f32 %v844, 0.0
          %v861 = vmax.f32 %v845, 0.0
          %v862 = vld [vmem:[#allocation9] sm:$0xff]
          %v863 = vld [vmem:[#allocation9 + $0x8] sm:$0xff]
          %v864 = vld [vmem:[#allocation9 + $0x10] sm:$0xff]
          %v865 = vld [vmem:[#allocation9 + $0x18] sm:$0xff]
          %v866 = vld [vmem:[#allocation9 + $0x20] sm:$0xff]
          %v867 = vld [vmem:[#allocation9 + $0x28] sm:$0xff]
          %v868 = vld [vmem:[#allocation9 + $0x30] sm:$0xff]
          %v869 = vld [vmem:[#allocation9 + $0x38] sm:$0xff]
          %v870 = vld [vmem:[#allocation9 + $0x40] sm:$0xff]
          %v871 = vld [vmem:[#allocation9 + $0x48] sm:$0xff]
          %v872 = vld [vmem:[#allocation9 + $0x50] sm:$0xff]
          %v873 = vld [vmem:[#allocation9 + $0x58] sm:$0xff]
          %v874 = vld [vmem:[#allocation9 + $0x60] sm:$0xff]
          %v875 = vld [vmem:[#allocation9 + $0x68] sm:$0xff]
          %v876 = vld [vmem:[#allocation9 + $0x70] sm:$0xff]
          %v877 = vld [vmem:[#allocation9 + $0x78] sm:$0xff]
          %v878 = vmul.f32 %v846, %v862
          %v879 = vmul.f32 %v847, %v863
          %v880 = vmul.f32 %v848, %v864
          %v881 = vmul.f32 %v849, %v865
          %v882 = vmul.f32 %v850, %v866
          %v883 = vmul.f32 %v851, %v867
          %v884 = vmul.f32 %v852, %v868
          %v885 = vmul.f32 %v853, %v869
          %v886 = vmul.f32 %v854, %v870
          %v887 = vmul.f32 %v855, %v871
          %v888 = vmul.f32 %v856, %v872
          %v889 = vmul.f32 %v857, %v873
          %v890 = vmul.f32 %v858, %v874
          %v891 = vmul.f32 %v859, %v875
          %v892 = vmul.f32 %v860, %v876
          %v893 = vmul.f32 %v861, %v877
          %894 = vst [vmem:[%s354] sm:$0xff] %v878
          %895 = vst [vmem:[%s354 + $0x8] sm:$0xff] %v879
          %896 = vst [vmem:[%s354 + $0x10] sm:$0xff] %v880
          %897 = vst [vmem:[%s354 + $0x18] sm:$0xff] %v881
          %898 = vst [vmem:[%s354 + $0x20] sm:$0xff] %v882
          %899 = vst [vmem:[%s354 + $0x28] sm:$0xff] %v883
          %900 = vst [vmem:[%s354 + $0x30] sm:$0xff] %v884
          %901 = vst [vmem:[%s354 + $0x38] sm:$0xff] %v885
          %902 = vst [vmem:[%s354 + $0x40] sm:$0xff] %v886
          %903 = vst [vmem:[%s354 + $0x48] sm:$0xff] %v887
          %904 = vst [vmem:[%s354 + $0x50] sm:$0xff] %v888
          %905 = vst [vmem:[%s354 + $0x58] sm:$0xff] %v889
          %906 = vst [vmem:[%s354 + $0x60] sm:$0xff] %v890
          %907 = vst [vmem:[%s354 + $0x68] sm:$0xff] %v891
          %908 = vst [vmem:[%s354 + $0x70] sm:$0xff] %v892
          %909 = vst [vmem:[%s354 + $0x78] sm:$0xff] %v893
        $region68: #{tpu_custom_call.1} parent=43 // pred_fallthru
          _
        %s910 = sand.u32 %s185, 1
        %s911 = scalar_lea.sflag [#allocation5], %s910
        %s912 = sand.u32 %s185, 1
        %s913 = smul.addr %s912, 128
        %s914 = scalar_lea.vmem [#allocation11], %s913
        // Predicated region
        $region69: #{tpu_custom_call.1} parent=43 // pred_check
          %p915 = pneg %p195
        $region70: #{tpu_custom_call.1} parent=43 // pred_check_branch
          %917 = sbr.rel (%p915) target = $region72
        $region71: #{tpu_custom_call.1} parent=43 // pred_region
          %s919 = ssub.s32 2048, 2048
          %920 = vsyncadd %s911, %s919
          %s921 = smul.addr %s31, 16
          %s922 = smul.addr %s921, 128
          %s923 = scalar_lea.hbm %s6, %s922
          %s924 = sshll.u32 %s914, 4
          %s925 = int_to_ptr.vmem [resolvable:$true] %s924
          %930 = dma.vmem_to_hbm [thread:$0]  %s925, 2048, %s923, %s911, 256, 256, 16
        $region72: #{tpu_custom_call.1} parent=43 // pred_fallthru
          _
      $region44: #{tpu_custom_call.1} parent=5 // pred_fallthru
        _
      %p931 = scmp.le.s32.totalorder 2, %s22
      // Predicated region
      $region73: #{tpu_custom_call.1} parent=5 // pred_check
        %p932 = pneg %p931
      $region74: #{tpu_custom_call.1} parent=5 // pred_check_branch
        %934 = sbr.rel (%p932) target = $region76
      $region75: #{tpu_custom_call.1} parent=5 // pred_region
        %s935 = ssub.s32 %s22, 2
        // Predicated region
        $region77: #{tpu_custom_call.1} parent=75 // pred_check
          %p936 = pneg %p201
        $region78: #{tpu_custom_call.1} parent=75 // pred_check_branch
          %938 = sbr.rel (%p936) target = $region80
        $region79: #{tpu_custom_call.1} parent=75 // pred_region
          %s939 = sand.u32 %s186, 1
          %s940 = scalar_lea.sflag [#allocation5], %s939
          %s941 = sand.u32 %s186, 1
          %s942 = smul.addr %s941, 128
          %s943 = scalar_lea.vmem [#allocation11], %s942
          %944 = dma.done %s940, 2048
        $region80: #{tpu_custom_call.1} parent=75 // pred_fallthru
          _
      $region76: #{tpu_custom_call.1} parent=5 // pred_fallthru
        _
    $region6: #{tpu_custom_call.1} parent=1 // loop_footer
      %s26 = sadd.s32 1, %s22
    $region7: #{tpu_custom_call.1} parent=1 // loop_footer_branch
      %21 = sbr.rel target = $region3
    $region8: #{tpu_custom_call.1} parent=1 // loop_exit
      _
    %945 = vsyncpa [#allocation4], 1
    %s946 = scalar_lea.sflag [#allocation4], 1
    %947 = vsyncpa %s946, 1
    %948 = vsyncpa [#allocation7], 1
    %s949 = scalar_lea.sflag [#allocation7], 1
    %950 = vsyncpa %s949, 1
    %951 = vsyncpa [#allocation10], 1
    %952 = vsyncpa [#allocation5], 1
    %s953 = scalar_lea.sflag [#allocation5], 1
    %954 = vsyncpa %s953, 1

</llo_original>
